<compile_context>
chip_gen: v6e
topology: v6e:2x2x1
jax: 0.10.0
libtpu: 0.0.40
codegen_flags: <defaults>
</compile_context>

<pallas_src>
import functools

import jax
import jax.numpy as jnp
from jax.experimental import pallas as pl
from jax.experimental.pallas import tpu as pltpu


_K = 32  # 27 conv taps + 1 bias column + 4 zero pad


# ----------------------------------------------------------------------------
# Pallas kernel: one fused matmul  taps[tile_m, 32] @ Wfold[32, 4*oc]
# (3x3 preconv + wavelet channel-select + 1x1 fusion + bias, all folded).
# ----------------------------------------------------------------------------
def _fused_conv_kernel(t_ref, w_ref, o_ref):
    # t_ref : (tile_m, 32)   lane-dense tap matrix (bias folded as ones column)
    # w_ref : (32, Cout)     folded weights (bias row at index 27, pad rows 0)
    # o_ref : (tile_m, Cout) Cout = 4*oc (one oc-block per wavelet sub-pixel)
    o_ref[...] = jnp.dot(
        t_ref[...], w_ref[...], preferred_element_type=jnp.float32
    ).astype(o_ref.dtype)


def _pick_tile(m, max_rows=2048):
    """Row-tile size. Prefer the largest divisor of m that is a multiple of 8
    and <= max_rows (no ragged tail); otherwise pad m up to a multiple of 128.
    max_rows ~2048 suits v7x's 64 MiB VMEM; v6e could use 4096-8192."""
    limit = min(m, max_rows)
    t = limit - (limit % 8)
    while t >= 8:
        if m % t == 0:
            return t, m
        t -= 8
    tile = min(max_rows, 128)
    m_pad = ((m + tile - 1) // tile) * tile
    return tile, m_pad


# ----------------------------------------------------------------------------
# Module parameters (shapes match the torch module: OIHW convs + biases)
# ----------------------------------------------------------------------------
def init_params(key, out_channels):
    oc = out_channels
    cr, cg, cb = oc // 4, oc // 2, oc // 4
    ks = jax.random.split(key, 8)
    scale = 0.1
    return {
        "w_r": jax.random.normal(ks[0], (4 * cr, 1, 3, 3), jnp.float32) * scale,
        "b_r": jax.random.normal(ks[1], (4 * cr,), jnp.float32) * scale,
        "w_g": jax.random.normal(ks[2], (4 * cg, 1, 3, 3), jnp.float32) * scale,
        "b_g": jax.random.normal(ks[3], (4 * cg,), jnp.float32) * scale,
        "w_b": jax.random.normal(ks[4], (4 * cb, 1, 3, 3), jnp.float32) * scale,
        "b_b": jax.random.normal(ks[5], (4 * cb,), jnp.float32) * scale,
        "w_f": jax.random.normal(ks[6], (oc, oc, 1, 1), jnp.float32) * scale,
        "b_f": jax.random.normal(ks[7], (oc,), jnp.float32) * scale,
    }


# ----------------------------------------------------------------------------
# Forward pass
# ----------------------------------------------------------------------------
@functools.partial(jax.jit, static_argnames=("out_channels", "out_dtype"))
def raw_wavelet_upsample(x_nchw, params, out_channels, out_dtype=jnp.float32):
    """x_nchw: [B, 4, H, W] (RGGB) -> [B, oc, 2H, 2W], matching the torch module."""
    oc = out_channels
    assert oc % 4 == 0, "out_channels must be divisible by 4"
    cr, cg, cb = oc // 4, oc // 2, oc // 4
    B, _, H, W = x_nchw.shape
    Cout = 4 * oc  # one oc-block per wavelet sub-pixel (ll, lh, hl, hh)

    # ---- fold: 3x3 branch convs -> wavelet channel-select -> 1x1 fusion ----
    # (all linear; the wavelet scatter is a per-sub-pixel channel permutation)
    def tap_w(wb):                                  # [C4,1,3,3] -> [3,3,C4]
        return jnp.transpose(wb[:, 0], (1, 2, 0))

    Wpre = jnp.zeros((3, 3, 3, 4 * oc), jnp.float32)     # (ky,kx,c_in,pre_ch)
    Wpre = Wpre.at[:, :, 0, 0:4 * cr].set(tap_w(params["w_r"]))
    Wpre = Wpre.at[:, :, 1, 4 * cr:4 * cr + 4 * cg].set(tap_w(params["w_g"]))
    Wpre = Wpre.at[:, :, 2, 4 * cr + 4 * cg:].set(tap_w(params["w_b"]))
    b_pre = jnp.concatenate([params["b_r"], params["b_g"], params["b_b"]])

    wfus = params["w_f"][:, :, 0, 0]                      # [oc_out, oc_in]
    cols, bcols = [], []
    for widx in range(4):                                 # widx = 2*di + dj
        sel = jnp.concatenate([
            jnp.arange(widx * cr, (widx + 1) * cr),
            4 * cr + jnp.arange(widx * cg, (widx + 1) * cg),
            4 * cr + 4 * cg + jnp.arange(widx * cb, (widx + 1) * cb)])
        cols.append(Wpre[..., sel] @ wfus.T)              # [3,3,3,oc]
        bcols.append(b_pre[sel] @ wfus.T + params["b_f"]) # [oc]
    Wcomb = jnp.concatenate(cols, axis=-1).reshape(27, Cout)  # rows = (ky,kx,cin)
    bcomb = jnp.concatenate(bcols).reshape(1, Cout)
    Wfold = jnp.concatenate(
        [Wcomb, bcomb, jnp.zeros((_K - 28, Cout), jnp.float32)], axis=0)  # [32, Cout]

    # ---- lane-dense im2col tap matrix (27 taps + ones column + zero pad) ----
    r = x_nchw[:, 0]
    g = (x_nchw[:, 1] + x_nchw[:, 2]) * 0.5
    b = x_nchw[:, 3]
    rgb = jnp.stack([r, g, b], axis=-1)                   # [B, H, W, 3]
    xp = jnp.pad(rgb, ((0, 0), (1, 1), (1, 1), (0, 0)))   # [B, H+2, W+2, 3]
    taps = jnp.stack([xp[:, ky:ky + H, kx:kx + W, :]
                      for ky in range(3) for kx in range(3)], axis=3)  # [B,H,W,9,3]
    M = B * H * W
    t = jnp.concatenate(
        [taps.reshape(B, H * W, 27),
         jnp.ones((B, H * W, 1), jnp.float32),
         jnp.zeros((B, H * W, _K - 28), jnp.float32)], axis=-1)
    t = t.reshape(M, _K)                                   # [B*H*W, 32]

    tile_m, m_pad = _pick_tile(M)
    if m_pad != M:
        t = jnp.pad(t, ((0, m_pad - M), (0, 0)))           # zero rows -> sliced off

    out_itemsize = jnp.dtype(out_dtype).itemsize
    y = pl.pallas_call(
        _fused_conv_kernel,
        out_shape=jax.ShapeDtypeStruct((m_pad, Cout), out_dtype),
        grid_spec=pltpu.PrefetchScalarGridSpec(
            num_scalar_prefetch=0,
            grid=(m_pad // tile_m,),
            in_specs=[
                pl.BlockSpec((tile_m, _K), lambda i: (i, 0)),
                pl.BlockSpec((_K, Cout), lambda i: (0, 0)),   # resident weights
            ],
            out_specs=pl.BlockSpec((tile_m, Cout), lambda i: (i, 0)),
        ),
        compiler_params=pltpu.CompilerParams(
            dimension_semantics=("parallel",),
            vmem_limit_bytes=32 * 1024 * 1024),
        cost_estimate=pl.CostEstimate(
            flops=2 * m_pad * _K * Cout,
            transcendentals=0,
            bytes_accessed=m_pad * _K * 4 + _K * Cout * 4 + m_pad * Cout * out_itemsize),
    )(t, Wfold)

    # wavelet even/odd scatter + NHWC->NCHW, fused into a single XLA transpose.
    y = y[:M].reshape(B, H, W, 2, 2, oc)           # [B, h, w, di, dj, c]
    y = jnp.transpose(y, (0, 5, 1, 3, 2, 4))       # [B, c, h, di, w, dj]
    return y.reshape(B, oc, 2 * H, 2 * W)


# ----------------------------------------------------------------------------
# Pure-JAX reference (mirrors the PyTorch module) for correctness checking
# ----------------------------------------------------------------------------
def _reference(x_nchw, params, out_channels):
    oc = out_channels

    def conv3x3(x, w, bias):
        y = jax.lax.conv_general_dilated(
            x, w, (1, 1), ((1, 1), (1, 1)),
            dimension_numbers=("NCHW", "OIHW", "NCHW"))
        return y + bias.reshape(1, -1, 1, 1)

    def wavelet_up(x, w, bias):
        x = conv3x3(x, w, bias)
        B, C4, H, W = x.shape
        c = C4 // 4
        ll, lh, hl, hh = x[:, :c], x[:, c:2 * c], x[:, 2 * c:3 * c], x[:, 3 * c:]
        y = jnp.zeros((B, c, 2 * H, 2 * W), jnp.float32)
        y = y.at[:, :, 0::2, 0::2].set(ll)
        y = y.at[:, :, 0::2, 1::2].set(lh)
        y = y.at[:, :, 1::2, 0::2].set(hl)
        y = y.at[:, :, 1::2, 1::2].set(hh)
        return y

    r = x_nchw[:, 0:1]
    g = (x_nchw[:, 1:2] + x_nchw[:, 2:3]) / 2
    b = x_nchw[:, 3:4]
    r_up = wavelet_up(r, params["w_r"], params["b_r"])
    g_up = wavelet_up(g, params["w_g"], params["b_g"])
    b_up = wavelet_up(b, params["w_b"], params["b_b"])
    combined = jnp.concatenate([r_up, g_up, b_up], axis=1)
    out = jax.lax.conv_general_dilated(
        combined, params["w_f"], (1, 1), ((0, 0), (0, 0)),
        dimension_numbers=("NCHW", "OIHW", "NCHW"))
    return out + params["b_f"].reshape(1, oc, 1, 1)


if __name__ == "__main__":
    B, H, W = 2, 16, 16
    out_channels = 32   # divisible by 4; 4*oc = 128 -> lane-dense kernel output

    key = jax.random.PRNGKey(0)
    kx_, kp = jax.random.split(key)
    x = jax.random.normal(kx_, (B, 4, H, W), jnp.float32)   # raw RGGB, NCHW
    params = init_params(kp, out_channels)

    # f32 output (default): exact parity with the f32 reference.
    out = raw_wavelet_upsample(x, params, out_channels)
    out = jax.block_until_ready(out)
    assert out.shape == (B, out_channels, 2 * H, 2 * W), out.shape

    ref = _reference(x, params, out_channels)
    err = float(jnp.max(jnp.abs(out - ref)))
    assert jnp.allclose(out, ref, atol=1e-4, rtol=1e-4), err

    # bf16 output path (halves kernel HBM writes; looser parity vs f32 ref).
    out_bf16 = raw_wavelet_upsample(x, params, out_channels,
                                    out_dtype=jnp.bfloat16)
    out_bf16 = jax.block_until_ready(out_bf16)
    err_bf16 = float(jnp.max(jnp.abs(out_bf16.astype(jnp.float32) - ref)))
    assert jnp.allclose(out_bf16.astype(jnp.float32), ref,
                        atol=5e-2, rtol=5e-2), err_bf16

    print("KERNEL_OK")
</pallas_src>

<mosaic_0001>
module attributes {stable_mosaic.version = 11 : i64} {
  func.func @_fused_conv_kernel(%arg0: i32, %arg1: memref<512x32xf32, #tpu.memory_space<vmem>>, %arg2: memref<32x128xf32, #tpu.memory_space<vmem>>, %arg3: memref<512x128xf32, #tpu.memory_space<vmem>>) attributes {dimension_semantics = [#tpu.dimension_semantics<parallel>], iteration_bounds = array<i64: 1>, scalar_prefetch = 0 : i64, scratch_operands = 0 : i64, tpu.core_type = #tpu.core_type<tc>, window_params = [{transform_indices = @transform_0, window_bounds = array<i64: 512, 32>}, {pipeline_mode = #tpu.pipeline_mode<synchronous>, transform_indices = @transform_1, window_bounds = array<i64: 32, 128>}, {transform_indices = @transform_2, window_bounds = array<i64: 512, 128>}]} {
    %c0 = arith.constant 0 : index
    %c0_0 = arith.constant 0 : index
    %0 = vector.load %arg1[%c0, %c0_0] : memref<512x32xf32, #tpu.memory_space<vmem>>, vector<512x32xf32>
    %c0_1 = arith.constant 0 : index
    %c0_2 = arith.constant 0 : index
    %1 = vector.load %arg2[%c0_1, %c0_2] : memref<32x128xf32, #tpu.memory_space<vmem>>, vector<32x128xf32>
    %cst = arith.constant dense<0.000000e+00> : vector<512x128xf32>
    %2 = tpu.matmul %0, %1, %cst {dimension_numbers = #tpu.dot_dimension_numbers<[1], [0], [0], [1], [0, 0, 1, 1], [], []>} : vector<512x32xf32>, vector<32x128xf32>, vector<512x128xf32> -> vector<512x128xf32>
    %c0_3 = arith.constant 0 : index
    %c0_4 = arith.constant 0 : index
    %3 = vector.load %arg3[%c0_3, %c0_4] : memref<512x128xf32, #tpu.memory_space<vmem>>, vector<512x128xf32>
    tpu.vector_store %arg3[%c0_3, %c0_4], %2 {strides = array<i32>} : memref<512x128xf32, #tpu.memory_space<vmem>>, vector<512x128xf32>,
    return
  }
  func.func @transform_0(%arg0: i32) -> (i32, i32) {
    %c0_i32 = arith.constant 0 : i32
    %c0_i32_0 = arith.constant 0 : i32
    return %arg0, %c0_i32 : i32, i32
  }
  func.func @transform_1(%arg0: i32) -> (i32, i32) {
    %c0_i32 = arith.constant 0 : i32
    %c0_i32_0 = arith.constant 0 : i32
    %c0_i32_1 = arith.constant 0 : i32
    return %c0_i32, %c0_i32_0 : i32, i32
  }
  func.func @transform_2(%arg0: i32) -> (i32, i32) {
    %c0_i32 = arith.constant 0 : i32
    %c0_i32_0 = arith.constant 0 : i32
    return %arg0, %c0_i32 : i32, i32
  }
}

</mosaic_0001>

<llo_original>
// kernel: raw_wavelet_upsample.1
$region0: #{raw_wavelet_upsample.1}
  #allocation0 [shape = 'u32[]', space=smem, size = 0x4, offset = 0x4, fixed_abs, tag = 'smem constant byte address 0x4 - core index']
  #allocation1 [shape = 'u32[144,128]{1,0:T(1,128)}', space=vmem, size = 0x12000, scoped, tag = 'internal scratch']
  %s0 = inlined_call_operand.vmem [shape: f32[512,32], index: 0, kind: input, shape index: {}]
  %s1 = inlined_call_operand.vmem [shape: f32[32,128], index: 1, kind: input, shape index: {}]
  %s2 = inlined_call_operand.vmem [shape: f32[512,128], index: 2, kind: output, shape index: {}]
  %s3 = sld [smem:[#allocation0]]
  $region18: #{raw_wavelet_upsample.1} parent=0
    _
  %s5 = ssub.s32 1, %s3
  %s6 = scalar_select 0, %s5, %s3
  // Predicated region
  $region2: #{raw_wavelet_upsample.1} parent=0 // pred_check
    _
  $region3: #{raw_wavelet_upsample.1} parent=0 // pred_check_branch
    %8 = sbr.rel (0) target = $region5
  $region4: #{raw_wavelet_upsample.1} parent=0 // pred_region
    _
  $region5: #{raw_wavelet_upsample.1} parent=0 // pred_fallthru
    _
  // Predicated region
  $region6: #{raw_wavelet_upsample.1} parent=0 // pred_check
    _
  $region7: #{raw_wavelet_upsample.1} parent=0 // pred_check_branch
    %10 = sbr.rel (0) target = $region9
  $region8: #{raw_wavelet_upsample.1} parent=0 // pred_region
    _
  $region9: #{raw_wavelet_upsample.1} parent=0 // pred_fallthru
    _
  %v11 = vld [vmem:[%s0] sm:$0xff]
  %v12 = vld [vmem:[%s0 + $0x8] sm:$0xff]
  %v13 = vld [vmem:[%s0 + $0x10] sm:$0xff]
  %v14 = vld [vmem:[%s0 + $0x18] sm:$0xff]
  %v15 = vld [vmem:[%s0 + $0x20] sm:$0xff]
  %v16 = vld [vmem:[%s0 + $0x28] sm:$0xff]
  %v17 = vld [vmem:[%s0 + $0x30] sm:$0xff]
  %v18 = vld [vmem:[%s0 + $0x38] sm:$0xff]
  %v19 = vld [vmem:[%s0 + $0x40] sm:$0xff]
  %v20 = vld [vmem:[%s0 + $0x48] sm:$0xff]
  %v21 = vld [vmem:[%s0 + $0x50] sm:$0xff]
  %v22 = vld [vmem:[%s0 + $0x58] sm:$0xff]
  %v23 = vld [vmem:[%s0 + $0x60] sm:$0xff]
  %v24 = vld [vmem:[%s0 + $0x68] sm:$0xff]
  %v25 = vld [vmem:[%s0 + $0x70] sm:$0xff]
  %v26 = vld [vmem:[%s0 + $0x78] sm:$0xff]
  %v27 = vld [vmem:[%s0 + $0x80] sm:$0xff]
  %v28 = vld [vmem:[%s0 + $0x88] sm:$0xff]
  %v29 = vld [vmem:[%s0 + $0x90] sm:$0xff]
  %v30 = vld [vmem:[%s0 + $0x98] sm:$0xff]
  %v31 = vld [vmem:[%s0 + $0xa0] sm:$0xff]
  %v32 = vld [vmem:[%s0 + $0xa8] sm:$0xff]
  %v33 = vld [vmem:[%s0 + $0xb0] sm:$0xff]
  %v34 = vld [vmem:[%s0 + $0xb8] sm:$0xff]
  %v35 = vld [vmem:[%s0 + $0xc0] sm:$0xff]
  %v36 = vld [vmem:[%s0 + $0xc8] sm:$0xff]
  %v37 = vld [vmem:[%s0 + $0xd0] sm:$0xff]
  %v38 = vld [vmem:[%s0 + $0xd8] sm:$0xff]
  %v39 = vld [vmem:[%s0 + $0xe0] sm:$0xff]
  %v40 = vld [vmem:[%s0 + $0xe8] sm:$0xff]
  %v41 = vld [vmem:[%s0 + $0xf0] sm:$0xff]
  %v42 = vld [vmem:[%s0 + $0xf8] sm:$0xff]
  %v43 = vld [vmem:[%s0 + $0x100] sm:$0xff]
  %v44 = vld [vmem:[%s0 + $0x108] sm:$0xff]
  %v45 = vld [vmem:[%s0 + $0x110] sm:$0xff]
  %v46 = vld [vmem:[%s0 + $0x118] sm:$0xff]
  %v47 = vld [vmem:[%s0 + $0x120] sm:$0xff]
  %v48 = vld [vmem:[%s0 + $0x128] sm:$0xff]
  %v49 = vld [vmem:[%s0 + $0x130] sm:$0xff]
  %v50 = vld [vmem:[%s0 + $0x138] sm:$0xff]
  %v51 = vld [vmem:[%s0 + $0x140] sm:$0xff]
  %v52 = vld [vmem:[%s0 + $0x148] sm:$0xff]
  %v53 = vld [vmem:[%s0 + $0x150] sm:$0xff]
  %v54 = vld [vmem:[%s0 + $0x158] sm:$0xff]
  %v55 = vld [vmem:[%s0 + $0x160] sm:$0xff]
  %v56 = vld [vmem:[%s0 + $0x168] sm:$0xff]
  %v57 = vld [vmem:[%s0 + $0x170] sm:$0xff]
  %v58 = vld [vmem:[%s0 + $0x178] sm:$0xff]
  %v59 = vld [vmem:[%s0 + $0x180] sm:$0xff]
  %v60 = vld [vmem:[%s0 + $0x188] sm:$0xff]
  %v61 = vld [vmem:[%s0 + $0x190] sm:$0xff]
  %v62 = vld [vmem:[%s0 + $0x198] sm:$0xff]
  %v63 = vld [vmem:[%s0 + $0x1a0] sm:$0xff]
  %v64 = vld [vmem:[%s0 + $0x1a8] sm:$0xff]
  %v65 = vld [vmem:[%s0 + $0x1b0] sm:$0xff]
  %v66 = vld [vmem:[%s0 + $0x1b8] sm:$0xff]
  %v67 = vld [vmem:[%s0 + $0x1c0] sm:$0xff]
  %v68 = vld [vmem:[%s0 + $0x1c8] sm:$0xff]
  %v69 = vld [vmem:[%s0 + $0x1d0] sm:$0xff]
  %v70 = vld [vmem:[%s0 + $0x1d8] sm:$0xff]
  %v71 = vld [vmem:[%s0 + $0x1e0] sm:$0xff]
  %v72 = vld [vmem:[%s0 + $0x1e8] sm:$0xff]
  %v73 = vld [vmem:[%s0 + $0x1f0] sm:$0xff]
  %v74 = vld [vmem:[%s0 + $0x1f8] sm:$0xff]
  %v75 = vld [vmem:[%s1] sm:$0xff]
  %v76 = vld [vmem:[%s1 + $0x8] sm:$0xff]
  %v77 = vld [vmem:[%s1 + $0x10] sm:$0xff]
  %v78 = vld [vmem:[%s1 + $0x18] sm:$0xff]
  %vm79 = vcmask 261120
  %v81 = vsel %vm79, %v11, 0
  %v84 = vsel %vm79, %v12, 0
  %v87 = vsel %vm79, %v13, 0
  %v90 = vsel %vm79, %v14, 0
  %v93 = vsel %vm79, %v15, 0
  %v96 = vsel %vm79, %v16, 0
  %v99 = vsel %vm79, %v17, 0
  %v102 = vsel %vm79, %v18, 0
  %v105 = vsel %vm79, %v19, 0
  %v108 = vsel %vm79, %v20, 0
  %v111 = vsel %vm79, %v21, 0
  %v114 = vsel %vm79, %v22, 0
  %v117 = vsel %vm79, %v23, 0
  %v120 = vsel %vm79, %v24, 0
  %v123 = vsel %vm79, %v25, 0
  %v126 = vsel %vm79, %v26, 0
  %v129 = vsel %vm79, %v27, 0
  %v132 = vsel %vm79, %v28, 0
  %v135 = vsel %vm79, %v29, 0
  %v138 = vsel %vm79, %v30, 0
  %v141 = vsel %vm79, %v31, 0
  %v144 = vsel %vm79, %v32, 0
  %v147 = vsel %vm79, %v33, 0
  %v150 = vsel %vm79, %v34, 0
  %v153 = vsel %vm79, %v35, 0
  %v156 = vsel %vm79, %v36, 0
  %v159 = vsel %vm79, %v37, 0
  %v162 = vsel %vm79, %v38, 0
  %v165 = vsel %vm79, %v39, 0
  %v168 = vsel %vm79, %v40, 0
  %v171 = vsel %vm79, %v41, 0
  %v174 = vsel %vm79, %v42, 0
  %v177 = vsel %vm79, %v43, 0
  %v180 = vsel %vm79, %v44, 0
  %v183 = vsel %vm79, %v45, 0
  %v186 = vsel %vm79, %v46, 0
  %v189 = vsel %vm79, %v47, 0
  %v192 = vsel %vm79, %v48, 0
  %v195 = vsel %vm79, %v49, 0
  %v198 = vsel %vm79, %v50, 0
  %v201 = vsel %vm79, %v51, 0
  %v204 = vsel %vm79, %v52, 0
  %v207 = vsel %vm79, %v53, 0
  %v210 = vsel %vm79, %v54, 0
  %v213 = vsel %vm79, %v55, 0
  %v216 = vsel %vm79, %v56, 0
  %v219 = vsel %vm79, %v57, 0
  %v222 = vsel %vm79, %v58, 0
  %v225 = vsel %vm79, %v59, 0
  %v228 = vsel %vm79, %v60, 0
  %v231 = vsel %vm79, %v61, 0
  %v234 = vsel %vm79, %v62, 0
  %v237 = vsel %vm79, %v63, 0
  %v240 = vsel %vm79, %v64, 0
  %v243 = vsel %vm79, %v65, 0
  %v246 = vsel %vm79, %v66, 0
  %v249 = vsel %vm79, %v67, 0
  %v252 = vsel %vm79, %v68, 0
  %v255 = vsel %vm79, %v69, 0
  %v258 = vsel %vm79, %v70, 0
  %v261 = vsel %vm79, %v71, 0
  %v264 = vsel %vm79, %v72, 0
  %v267 = vsel %vm79, %v73, 0
  %v270 = vsel %vm79, %v74, 0
  %272 = vmatprep.subr.mxu0 0.0
  %273 = vmatpush1.msra.mxu0 0.0
  %274 = vmatprep.subr.mxu0 0.0
  %275 = vmatpush1.msra.mxu0 0.0
  %276 = vmatprep.subr.mxu0 0.0
  %277 = vmatpush1.msra.mxu0 0.0
  %278 = vmatprep.subr.mxu0 0.0
  %279 = vmatpush1.msra.mxu0 0.0
  %280 = vmatprep.subr.mxu0 0.0
  %281 = vmatpush1.msra.mxu0 0.0
  %282 = vmatprep.subr.mxu0 0.0
  %283 = vmatpush1.msra.mxu0 0.0
  %284 = vmatprep.subr.mxu0 0.0
  %285 = vmatpush1.msra.mxu0 0.0
  %286 = vmatprep.subr.mxu0 0.0
  %287 = vmatpush1.msra.mxu0 0.0
  %288 = vmatprep.subr.mxu0 0.0
  %289 = vmatpush1.msra.mxu0 0.0
  %290 = vmatprep.subr.mxu0 0.0
  %291 = vmatpush1.msra.mxu0 0.0
  %292 = vmatprep.subr.mxu0 0.0
  %293 = vmatpush1.msra.mxu0 0.0
  %294 = vmatprep.subr.mxu0 0.0
  %295 = vmatpush1.msra.mxu0 0.0
  %296 = vmatprep.subr.mxu0 0.0
  %297 = vmatpush1.msra.mxu0 %v78
  %298 = vmatprep.subr.mxu0 0.0
  %299 = vmatpush1.msra.mxu0 %v77
  %300 = vmatprep.subr.mxu0 0.0
  %301 = vmatpush1.msra.mxu0 %v76
  %302 = vmatprep.subr.mxu0 0.0
  %303 = vmatpush1.msra.mxu0 %v75
  %304 = vmatprep.subr.mxu0 0.0
  %305 = vmatpush2.msra.mxu0 0.0
  %306 = vmatprep.subr.mxu0 0.0
  %307 = vmatpush2.msra.mxu0 0.0
  %308 = vmatprep.subr.mxu0 0.0
  %309 = vmatpush2.msra.mxu0 0.0
  %310 = vmatprep.subr.mxu0 0.0
  %311 = vmatpush2.msra.mxu0 0.0
  %312 = vmatprep.subr.mxu0 0.0
  %313 = vmatpush2.msra.mxu0 0.0
  %314 = vmatprep.subr.mxu0 0.0
  %315 = vmatpush2.msra.mxu0 0.0
  %316 = vmatprep.subr.mxu0 0.0
  %317 = vmatpush2.msra.mxu0 0.0
  %318 = vmatprep.subr.mxu0 0.0
  %319 = vmatpush2.msra.mxu0 0.0
  %320 = vmatprep.subr.mxu0 0.0
  %321 = vmatpush2.msra.mxu0 0.0
  %322 = vmatprep.subr.mxu0 0.0
  %323 = vmatpush2.msra.mxu0 0.0
  %324 = vmatprep.subr.mxu0 0.0
  %325 = vmatpush2.msra.mxu0 0.0
  %326 = vmatprep.subr.mxu0 0.0
  %327 = vmatpush2.msra.mxu0 0.0
  %328 = vmatprep.subr.mxu0 0.0
  %329 = vmatpush2.msra.mxu0 0.0
  %330 = vmatprep.subr.mxu0 0.0
  %331 = vmatpush2.msra.mxu0 0.0
  %332 = vmatprep.subr.mxu0 0.0
  %333 = vmatpush2.msra.mxu0 0.0
  %334 = vmatprep.subr.mxu0 0.0
  %335 = vmatpush2.msra.mxu0 0.0
  %336 = vmatprep.mubr.f32.mxu0 0.0
  %337 = vmatmul.mubr.f32.gmra.mxu0 %v81
  %v338 = vpop.f32.mrf.mxu0
  %v339 = vadd.f32 0.0, %v338
  %v340 = vpop.f32.mrf.mxu0
  %341 = vmatprep.mubr.f32.mxu0 0.0
  %342 = vmatmul.mubr.f32.gmra.mxu0 %v84
  %v343 = vpop.f32.mrf.mxu0
  %v344 = vadd.f32 0.0, %v343
  %v345 = vpop.f32.mrf.mxu0
  %346 = vmatprep.mubr.f32.mxu0 0.0
  %347 = vmatmul.mubr.f32.gmra.mxu0 %v87
  %v348 = vpop.f32.mrf.mxu0
  %v349 = vadd.f32 0.0, %v348
  %v350 = vpop.f32.mrf.mxu0
  %351 = vmatprep.mubr.f32.mxu0 0.0
  %352 = vmatmul.mubr.f32.gmra.mxu0 %v90
  %v353 = vpop.f32.mrf.mxu0
  %v354 = vadd.f32 0.0, %v353
  %v355 = vpop.f32.mrf.mxu0
  %356 = vmatprep.mubr.f32.mxu0 0.0
  %357 = vmatmul.mubr.f32.gmra.mxu0 %v93
  %v358 = vpop.f32.mrf.mxu0
  %v359 = vadd.f32 0.0, %v358
  %v360 = vpop.f32.mrf.mxu0
  %361 = vmatprep.mubr.f32.mxu0 0.0
  %362 = vmatmul.mubr.f32.gmra.mxu0 %v96
  %v363 = vpop.f32.mrf.mxu0
  %v364 = vadd.f32 0.0, %v363
  %v365 = vpop.f32.mrf.mxu0
  %366 = vmatprep.mubr.f32.mxu0 0.0
  %367 = vmatmul.mubr.f32.gmra.mxu0 %v99
  %v368 = vpop.f32.mrf.mxu0
  %v369 = vadd.f32 0.0, %v368
  %v370 = vpop.f32.mrf.mxu0
  %371 = vmatprep.mubr.f32.mxu0 0.0
  %372 = vmatmul.mubr.f32.gmra.mxu0 %v102
  %v373 = vpop.f32.mrf.mxu0
  %v374 = vadd.f32 0.0, %v373
  %v375 = vpop.f32.mrf.mxu0
  %376 = vmatprep.mubr.f32.mxu0 0.0
  %377 = vmatmul.mubr.f32.gmra.mxu0 %v105
  %v378 = vpop.f32.mrf.mxu0
  %v379 = vadd.f32 0.0, %v378
  %v380 = vpop.f32.mrf.mxu0
  %381 = vmatprep.mubr.f32.mxu0 0.0
  %382 = vmatmul.mubr.f32.gmra.mxu0 %v108
  %v383 = vpop.f32.mrf.mxu0
  %v384 = vadd.f32 0.0, %v383
  %v385 = vpop.f32.mrf.mxu0
  %386 = vmatprep.mubr.f32.mxu0 0.0
  %387 = vmatmul.mubr.f32.gmra.mxu0 %v111
  %v388 = vpop.f32.mrf.mxu0
  %v389 = vadd.f32 0.0, %v388
  %v390 = vpop.f32.mrf.mxu0
  %391 = vmatprep.mubr.f32.mxu0 0.0
  %392 = vmatmul.mubr.f32.gmra.mxu0 %v114
  %v393 = vpop.f32.mrf.mxu0
  %v394 = vadd.f32 0.0, %v393
  %v395 = vpop.f32.mrf.mxu0
  %396 = vmatprep.mubr.f32.mxu0 0.0
  %397 = vmatmul.mubr.f32.gmra.mxu0 %v117
  %v398 = vpop.f32.mrf.mxu0
  %v399 = vadd.f32 0.0, %v398
  %v400 = vpop.f32.mrf.mxu0
  %401 = vmatprep.mubr.f32.mxu0 0.0
  %402 = vmatmul.mubr.f32.gmra.mxu0 %v120
  %v403 = vpop.f32.mrf.mxu0
  %v404 = vadd.f32 0.0, %v403
  %v405 = vpop.f32.mrf.mxu0
  %406 = vmatprep.mubr.f32.mxu0 0.0
  %407 = vmatmul.mubr.f32.gmra.mxu0 %v123
  %v408 = vpop.f32.mrf.mxu0
  %v409 = vadd.f32 0.0, %v408
  %v410 = vpop.f32.mrf.mxu0
  %411 = vmatprep.mubr.f32.mxu0 0.0
  %412 = vmatmul.mubr.f32.gmra.mxu0 %v126
  %v413 = vpop.f32.mrf.mxu0
  %v414 = vadd.f32 0.0, %v413
  %v415 = vpop.f32.mrf.mxu0
  %416 = vmatprep.mubr.f32.mxu0 0.0
  %417 = vmatmul.mubr.f32.gmra.mxu0 %v129
  %v418 = vpop.f32.mrf.mxu0
  %v419 = vadd.f32 0.0, %v418
  %v420 = vpop.f32.mrf.mxu0
  %421 = vmatprep.mubr.f32.mxu0 0.0
  %422 = vmatmul.mubr.f32.gmra.mxu0 %v132
  %v423 = vpop.f32.mrf.mxu0
  %v424 = vadd.f32 0.0, %v423
  %v425 = vpop.f32.mrf.mxu0
  %426 = vmatprep.mubr.f32.mxu0 0.0
  %427 = vmatmul.mubr.f32.gmra.mxu0 %v135
  %v428 = vpop.f32.mrf.mxu0
  %v429 = vadd.f32 0.0, %v428
  %v430 = vpop.f32.mrf.mxu0
  %431 = vmatprep.mubr.f32.mxu0 0.0
  %432 = vmatmul.mubr.f32.gmra.mxu0 %v138
  %v433 = vpop.f32.mrf.mxu0
  %v434 = vadd.f32 0.0, %v433
  %v435 = vpop.f32.mrf.mxu0
  %436 = vmatprep.mubr.f32.mxu0 0.0
  %437 = vmatmul.mubr.f32.gmra.mxu0 %v141
  %v438 = vpop.f32.mrf.mxu0
  %v439 = vadd.f32 0.0, %v438
  %v440 = vpop.f32.mrf.mxu0
  %441 = vmatprep.mubr.f32.mxu0 0.0
  %442 = vmatmul.mubr.f32.gmra.mxu0 %v144
  %v443 = vpop.f32.mrf.mxu0
  %v444 = vadd.f32 0.0, %v443
  %v445 = vpop.f32.mrf.mxu0
  %446 = vmatprep.mubr.f32.mxu0 0.0
  %447 = vmatmul.mubr.f32.gmra.mxu0 %v147
  %v448 = vpop.f32.mrf.mxu0
  %v449 = vadd.f32 0.0, %v448
  %v450 = vpop.f32.mrf.mxu0
  %451 = vmatprep.mubr.f32.mxu0 0.0
  %452 = vmatmul.mubr.f32.gmra.mxu0 %v150
  %v453 = vpop.f32.mrf.mxu0
  %v454 = vadd.f32 0.0, %v453
  %v455 = vpop.f32.mrf.mxu0
  %456 = vmatprep.mubr.f32.mxu0 0.0
  %457 = vmatmul.mubr.f32.gmra.mxu0 %v153
  %v458 = vpop.f32.mrf.mxu0
  %v459 = vadd.f32 0.0, %v458
  %v460 = vpop.f32.mrf.mxu0
  %461 = vmatprep.mubr.f32.mxu0 0.0
  %462 = vmatmul.mubr.f32.gmra.mxu0 %v156
  %v463 = vpop.f32.mrf.mxu0
  %v464 = vadd.f32 0.0, %v463
  %v465 = vpop.f32.mrf.mxu0
  %466 = vmatprep.mubr.f32.mxu0 0.0
  %467 = vmatmul.mubr.f32.gmra.mxu0 %v159
  %v468 = vpop.f32.mrf.mxu0
  %v469 = vadd.f32 0.0, %v468
  %v470 = vpop.f32.mrf.mxu0
  %471 = vmatprep.mubr.f32.mxu0 0.0
  %472 = vmatmul.mubr.f32.gmra.mxu0 %v162
  %v473 = vpop.f32.mrf.mxu0
  %v474 = vadd.f32 0.0, %v473
  %v475 = vpop.f32.mrf.mxu0
  %476 = vmatprep.mubr.f32.mxu0 0.0
  %477 = vmatmul.mubr.f32.gmra.mxu0 %v165
  %v478 = vpop.f32.mrf.mxu0
  %v479 = vadd.f32 0.0, %v478
  %v480 = vpop.f32.mrf.mxu0
  %481 = vmatprep.mubr.f32.mxu0 0.0
  %482 = vmatmul.mubr.f32.gmra.mxu0 %v168
  %v483 = vpop.f32.mrf.mxu0
  %v484 = vadd.f32 0.0, %v483
  %v485 = vpop.f32.mrf.mxu0
  %486 = vmatprep.mubr.f32.mxu0 0.0
  %487 = vmatmul.mubr.f32.gmra.mxu0 %v171
  %v488 = vpop.f32.mrf.mxu0
  %v489 = vadd.f32 0.0, %v488
  %v490 = vpop.f32.mrf.mxu0
  %491 = vmatprep.mubr.f32.mxu0 0.0
  %492 = vmatmul.mubr.f32.gmra.mxu0 %v174
  %v493 = vpop.f32.mrf.mxu0
  %v494 = vadd.f32 0.0, %v493
  %v495 = vpop.f32.mrf.mxu0
  %496 = vmatprep.mubr.f32.mxu0 0.0
  %497 = vmatmul.mubr.f32.gmra.mxu0 %v177
  %v498 = vpop.f32.mrf.mxu0
  %v499 = vadd.f32 0.0, %v498
  %v500 = vpop.f32.mrf.mxu0
  %501 = vmatprep.mubr.f32.mxu0 0.0
  %502 = vmatmul.mubr.f32.gmra.mxu0 %v180
  %v503 = vpop.f32.mrf.mxu0
  %v504 = vadd.f32 0.0, %v503
  %v505 = vpop.f32.mrf.mxu0
  %506 = vmatprep.mubr.f32.mxu0 0.0
  %507 = vmatmul.mubr.f32.gmra.mxu0 %v183
  %v508 = vpop.f32.mrf.mxu0
  %v509 = vadd.f32 0.0, %v508
  %v510 = vpop.f32.mrf.mxu0
  %511 = vmatprep.mubr.f32.mxu0 0.0
  %512 = vmatmul.mubr.f32.gmra.mxu0 %v186
  %v513 = vpop.f32.mrf.mxu0
  %v514 = vadd.f32 0.0, %v513
  %v515 = vpop.f32.mrf.mxu0
  %516 = vmatprep.mubr.f32.mxu0 0.0
  %517 = vmatmul.mubr.f32.gmra.mxu0 %v189
  %v518 = vpop.f32.mrf.mxu0
  %v519 = vadd.f32 0.0, %v518
  %v520 = vpop.f32.mrf.mxu0
  %521 = vmatprep.mubr.f32.mxu0 0.0
  %522 = vmatmul.mubr.f32.gmra.mxu0 %v192
  %v523 = vpop.f32.mrf.mxu0
  %v524 = vadd.f32 0.0, %v523
  %v525 = vpop.f32.mrf.mxu0
  %526 = vmatprep.mubr.f32.mxu0 0.0
  %527 = vmatmul.mubr.f32.gmra.mxu0 %v195
  %v528 = vpop.f32.mrf.mxu0
  %v529 = vadd.f32 0.0, %v528
  %v530 = vpop.f32.mrf.mxu0
  %531 = vmatprep.mubr.f32.mxu0 0.0
  %532 = vmatmul.mubr.f32.gmra.mxu0 %v198
  %v533 = vpop.f32.mrf.mxu0
  %v534 = vadd.f32 0.0, %v533
  %v535 = vpop.f32.mrf.mxu0
  %536 = vmatprep.mubr.f32.mxu0 0.0
  %537 = vmatmul.mubr.f32.gmra.mxu0 %v201
  %v538 = vpop.f32.mrf.mxu0
  %v539 = vadd.f32 0.0, %v538
  %v540 = vpop.f32.mrf.mxu0
  %541 = vmatprep.mubr.f32.mxu0 0.0
  %542 = vmatmul.mubr.f32.gmra.mxu0 %v204
  %v543 = vpop.f32.mrf.mxu0
  %v544 = vadd.f32 0.0, %v543
  %v545 = vpop.f32.mrf.mxu0
  %546 = vmatprep.mubr.f32.mxu0 0.0
  %547 = vmatmul.mubr.f32.gmra.mxu0 %v207
  %v548 = vpop.f32.mrf.mxu0
  %v549 = vadd.f32 0.0, %v548
  %v550 = vpop.f32.mrf.mxu0
  %551 = vmatprep.mubr.f32.mxu0 0.0
  %552 = vmatmul.mubr.f32.gmra.mxu0 %v210
  %v553 = vpop.f32.mrf.mxu0
  %v554 = vadd.f32 0.0, %v553
  %v555 = vpop.f32.mrf.mxu0
  %556 = vmatprep.mubr.f32.mxu0 0.0
  %557 = vmatmul.mubr.f32.gmra.mxu0 %v213
  %v558 = vpop.f32.mrf.mxu0
  %v559 = vadd.f32 0.0, %v558
  %v560 = vpop.f32.mrf.mxu0
  %561 = vmatprep.mubr.f32.mxu0 0.0
  %562 = vmatmul.mubr.f32.gmra.mxu0 %v216
  %v563 = vpop.f32.mrf.mxu0
  %v564 = vadd.f32 0.0, %v563
  %v565 = vpop.f32.mrf.mxu0
  %566 = vmatprep.mubr.f32.mxu0 0.0
  %567 = vmatmul.mubr.f32.gmra.mxu0 %v219
  %v568 = vpop.f32.mrf.mxu0
  %v569 = vadd.f32 0.0, %v568
  %v570 = vpop.f32.mrf.mxu0
  %571 = vmatprep.mubr.f32.mxu0 0.0
  %572 = vmatmul.mubr.f32.gmra.mxu0 %v222
  %v573 = vpop.f32.mrf.mxu0
  %v574 = vadd.f32 0.0, %v573
  %v575 = vpop.f32.mrf.mxu0
  %576 = vmatprep.mubr.f32.mxu0 0.0
  %577 = vmatmul.mubr.f32.gmra.mxu0 %v225
  %v578 = vpop.f32.mrf.mxu0
  %v579 = vadd.f32 0.0, %v578
  %v580 = vpop.f32.mrf.mxu0
  %581 = vmatprep.mubr.f32.mxu0 0.0
  %582 = vmatmul.mubr.f32.gmra.mxu0 %v228
  %v583 = vpop.f32.mrf.mxu0
  %v584 = vadd.f32 0.0, %v583
  %v585 = vpop.f32.mrf.mxu0
  %586 = vmatprep.mubr.f32.mxu0 0.0
  %587 = vmatmul.mubr.f32.gmra.mxu0 %v231
  %v588 = vpop.f32.mrf.mxu0
  %v589 = vadd.f32 0.0, %v588
  %v590 = vpop.f32.mrf.mxu0
  %591 = vmatprep.mubr.f32.mxu0 0.0
  %592 = vmatmul.mubr.f32.gmra.mxu0 %v234
  %v593 = vpop.f32.mrf.mxu0
  %v594 = vadd.f32 0.0, %v593
  %v595 = vpop.f32.mrf.mxu0
  %596 = vmatprep.mubr.f32.mxu0 0.0
  %597 = vmatmul.mubr.f32.gmra.mxu0 %v237
  %v598 = vpop.f32.mrf.mxu0
  %v599 = vadd.f32 0.0, %v598
  %v600 = vpop.f32.mrf.mxu0
  %601 = vmatprep.mubr.f32.mxu0 0.0
  %602 = vmatmul.mubr.f32.gmra.mxu0 %v240
  %v603 = vpop.f32.mrf.mxu0
  %v604 = vadd.f32 0.0, %v603
  %v605 = vpop.f32.mrf.mxu0
  %606 = vmatprep.mubr.f32.mxu0 0.0
  %607 = vmatmul.mubr.f32.gmra.mxu0 %v243
  %v608 = vpop.f32.mrf.mxu0
  %v609 = vadd.f32 0.0, %v608
  %v610 = vpop.f32.mrf.mxu0
  %611 = vmatprep.mubr.f32.mxu0 0.0
  %612 = vmatmul.mubr.f32.gmra.mxu0 %v246
  %v613 = vpop.f32.mrf.mxu0
  %v614 = vadd.f32 0.0, %v613
  %v615 = vpop.f32.mrf.mxu0
  %616 = vmatprep.mubr.f32.mxu0 0.0
  %617 = vmatmul.mubr.f32.gmra.mxu0 %v249
  %v618 = vpop.f32.mrf.mxu0
  %v619 = vadd.f32 0.0, %v618
  %v620 = vpop.f32.mrf.mxu0
  %621 = vmatprep.mubr.f32.mxu0 0.0
  %622 = vmatmul.mubr.f32.gmra.mxu0 %v252
  %v623 = vpop.f32.mrf.mxu0
  %v624 = vadd.f32 0.0, %v623
  %v625 = vpop.f32.mrf.mxu0
  %626 = vmatprep.mubr.f32.mxu0 0.0
  %627 = vmatmul.mubr.f32.gmra.mxu0 %v255
  %v628 = vpop.f32.mrf.mxu0
  %v629 = vadd.f32 0.0, %v628
  %v630 = vpop.f32.mrf.mxu0
  %631 = vmatprep.mubr.f32.mxu0 0.0
  %632 = vmatmul.mubr.f32.gmra.mxu0 %v258
  %v633 = vpop.f32.mrf.mxu0
  %v634 = vadd.f32 0.0, %v633
  %v635 = vpop.f32.mrf.mxu0
  %636 = vmatprep.mubr.f32.mxu0 0.0
  %637 = vmatmul.mubr.f32.gmra.mxu0 %v261
  %v638 = vpop.f32.mrf.mxu0
  %v639 = vadd.f32 0.0, %v638
  %v640 = vpop.f32.mrf.mxu0
  %641 = vmatprep.mubr.f32.mxu0 0.0
  %642 = vmatmul.mubr.f32.gmra.mxu0 %v264
  %v643 = vpop.f32.mrf.mxu0
  %v644 = vadd.f32 0.0, %v643
  %v645 = vpop.f32.mrf.mxu0
  %646 = vmatprep.mubr.f32.mxu0 0.0
  %647 = vmatmul.mubr.f32.gmra.mxu0 %v267
  %v648 = vpop.f32.mrf.mxu0
  %v649 = vadd.f32 0.0, %v648
  %v650 = vpop.f32.mrf.mxu0
  %651 = vmatprep.mubr.f32.mxu0 0.0
  %652 = vmatmul.mubr.f32.gmra.mxu0 %v270
  %v653 = vpop.f32.mrf.mxu0
  %v654 = vadd.f32 0.0, %v653
  %v655 = vpop.f32.mrf.mxu0
  %656 = vdwg.mxu0
  %657 = vst [vmem:[%s2] sm:$0xff] %v339
  %658 = vst [vmem:[%s2 + $0x8] sm:$0xff] %v344
  %659 = vst [vmem:[%s2 + $0x10] sm:$0xff] %v349
  %660 = vst [vmem:[%s2 + $0x18] sm:$0xff] %v354
  %661 = vst [vmem:[%s2 + $0x20] sm:$0xff] %v359
  %662 = vst [vmem:[%s2 + $0x28] sm:$0xff] %v364
  %663 = vst [vmem:[%s2 + $0x30] sm:$0xff] %v369
  %664 = vst [vmem:[%s2 + $0x38] sm:$0xff] %v374
  %665 = vst [vmem:[%s2 + $0x40] sm:$0xff] %v379
  %666 = vst [vmem:[%s2 + $0x48] sm:$0xff] %v384
  %667 = vst [vmem:[%s2 + $0x50] sm:$0xff] %v389
  %668 = vst [vmem:[%s2 + $0x58] sm:$0xff] %v394
  %669 = vst [vmem:[%s2 + $0x60] sm:$0xff] %v399
  %670 = vst [vmem:[%s2 + $0x68] sm:$0xff] %v404
  %671 = vst [vmem:[%s2 + $0x70] sm:$0xff] %v409
  %672 = vst [vmem:[%s2 + $0x78] sm:$0xff] %v414
  %673 = vst [vmem:[%s2 + $0x80] sm:$0xff] %v419
  %674 = vst [vmem:[%s2 + $0x88] sm:$0xff] %v424
  %675 = vst [vmem:[%s2 + $0x90] sm:$0xff] %v429
  %676 = vst [vmem:[%s2 + $0x98] sm:$0xff] %v434
  %677 = vst [vmem:[%s2 + $0xa0] sm:$0xff] %v439
  %678 = vst [vmem:[%s2 + $0xa8] sm:$0xff] %v444
  %679 = vst [vmem:[%s2 + $0xb0] sm:$0xff] %v449
  %680 = vst [vmem:[%s2 + $0xb8] sm:$0xff] %v454
  %681 = vst [vmem:[%s2 + $0xc0] sm:$0xff] %v459
  %682 = vst [vmem:[%s2 + $0xc8] sm:$0xff] %v464
  %683 = vst [vmem:[%s2 + $0xd0] sm:$0xff] %v469
  %684 = vst [vmem:[%s2 + $0xd8] sm:$0xff] %v474
  %685 = vst [vmem:[%s2 + $0xe0] sm:$0xff] %v479
  %686 = vst [vmem:[%s2 + $0xe8] sm:$0xff] %v484
  %687 = vst [vmem:[%s2 + $0xf0] sm:$0xff] %v489
  %688 = vst [vmem:[%s2 + $0xf8] sm:$0xff] %v494
  %689 = vst [vmem:[%s2 + $0x100] sm:$0xff] %v499
  %690 = vst [vmem:[%s2 + $0x108] sm:$0xff] %v504
  %691 = vst [vmem:[%s2 + $0x110] sm:$0xff] %v509
  %692 = vst [vmem:[%s2 + $0x118] sm:$0xff] %v514
  %693 = vst [vmem:[%s2 + $0x120] sm:$0xff] %v519
  %694 = vst [vmem:[%s2 + $0x128] sm:$0xff] %v524
  %695 = vst [vmem:[%s2 + $0x130] sm:$0xff] %v529
  %696 = vst [vmem:[%s2 + $0x138] sm:$0xff] %v534
  %697 = vst [vmem:[%s2 + $0x140] sm:$0xff] %v539
  %698 = vst [vmem:[%s2 + $0x148] sm:$0xff] %v544
  %699 = vst [vmem:[%s2 + $0x150] sm:$0xff] %v549
  %700 = vst [vmem:[%s2 + $0x158] sm:$0xff] %v554
  %701 = vst [vmem:[%s2 + $0x160] sm:$0xff] %v559
  %702 = vst [vmem:[%s2 + $0x168] sm:$0xff] %v564
  %703 = vst [vmem:[%s2 + $0x170] sm:$0xff] %v569
  %704 = vst [vmem:[%s2 + $0x178] sm:$0xff] %v574
  %705 = vst [vmem:[%s2 + $0x180] sm:$0xff] %v579
  %706 = vst [vmem:[%s2 + $0x188] sm:$0xff] %v584
  %707 = vst [vmem:[%s2 + $0x190] sm:$0xff] %v589
  %708 = vst [vmem:[%s2 + $0x198] sm:$0xff] %v594
  %709 = vst [vmem:[%s2 + $0x1a0] sm:$0xff] %v599
  %710 = vst [vmem:[%s2 + $0x1a8] sm:$0xff] %v604
  %711 = vst [vmem:[%s2 + $0x1b0] sm:$0xff] %v609
  %712 = vst [vmem:[%s2 + $0x1b8] sm:$0xff] %v614
  %713 = vst [vmem:[%s2 + $0x1c0] sm:$0xff] %v619
  %714 = vst [vmem:[%s2 + $0x1c8] sm:$0xff] %v624
  %715 = vst [vmem:[%s2 + $0x1d0] sm:$0xff] %v629
  %716 = vst [vmem:[%s2 + $0x1d8] sm:$0xff] %v634
  %717 = vst [vmem:[%s2 + $0x1e0] sm:$0xff] %v639
  %718 = vst [vmem:[%s2 + $0x1e8] sm:$0xff] %v644
  %719 = vst [vmem:[%s2 + $0x1f0] sm:$0xff] %v649
  %720 = vst [vmem:[%s2 + $0x1f8] sm:$0xff] %v654
  // Predicated region
  $region10: #{raw_wavelet_upsample.1} parent=0 // pred_check
    _
  $region11: #{raw_wavelet_upsample.1} parent=0 // pred_check_branch
    %722 = sbr.rel (0) target = $region13
  $region12: #{raw_wavelet_upsample.1} parent=0 // pred_region
    _
  $region13: #{raw_wavelet_upsample.1} parent=0 // pred_fallthru
    _
  // Predicated region
  $region14: #{raw_wavelet_upsample.1} parent=0 // pred_check
    _
  $region15: #{raw_wavelet_upsample.1} parent=0 // pred_check_branch
    %724 = sbr.rel (0) target = $region17
  $region16: #{raw_wavelet_upsample.1} parent=0 // pred_region
    _
  $region17: #{raw_wavelet_upsample.1} parent=0 // pred_fallthru
    _

</llo_original>
